<compile_context>
chip_gen: v5e
topology: v5e:2x2
jax: 0.10.0
libtpu: 0.0.40
codegen_flags: <defaults>
</compile_context>

<pallas_src>
import functools

import jax
import jax.numpy as jnp
from jax.experimental import pallas as pl
from jax.experimental.pallas import tpu as pltpu

# Model dimensions (Linear_QNet(input, hidden, out); middle layer is 48).
INPUT_SIZE = 16
HIDDEN_SIZE = 32
MID_SIZE = 48
OUTPUT_SIZE = 4
OUT_PAD = 128            # lane-dense output width (multiple of 128)
BATCH = 8


def fused_mlp_kernel(xa_ref, wa_ref, o_ref):
    # Single MXU push per batch tile; the bias is folded into wa via the ones
    # column appended to xa.  Output tile is lane-dense (last dim = 128).
    o_ref[...] = jnp.dot(xa_ref[...], wa_ref[...],
                         preferred_element_type=jnp.float32).astype(o_ref.dtype)
    # TODO(synk): the PyTorch forward print()s every intermediate activation;
    # those intermediates no longer exist after fusing the affine chain, so
    # the debug prints are omitted (they do not affect the returned value).


def fuse_params(params):
    """Collapse the activation-free 3-layer chain into one padded, bias-augmented affine."""
    w1t, b1, w2t, b2, w3t, b3 = params
    wf = w1t @ w2t @ w3t                      # (INPUT_SIZE, OUTPUT_SIZE)
    bf = b1 @ w2t @ w3t + b2 @ w3t + b3       # (1, OUTPUT_SIZE)
    wa = jnp.concatenate([wf, bf], axis=0)    # (INPUT_SIZE + 1, OUTPUT_SIZE)
    # Pad the output axis to 128 lanes -> unmasked stores in the kernel.
    wa = jnp.pad(wa, ((0, 0), (0, OUT_PAD - OUTPUT_SIZE)))
    return wa.astype(jnp.float32)


def _round_up(n, m):
    return ((n + m - 1) // m) * m


@functools.partial(jax.jit, static_argnames=("tb",))
def linear_qnet_forward(x, wa, *, tb=1024):
    """Batched fused forward.  x: (B, INPUT_SIZE) f32 -> (B, OUTPUT_SIZE) f32."""
    B, in_dim = x.shape
    ka = in_dim + 1                           # contraction dim incl. ones column

    # Tile selection: large tiles amortize the ~0.35 us per-grid-step overhead;
    # cap at the padded batch, and keep >= 2 grid steps (when B allows) so the
    # "parallel" batch axis can shard across v7x's two TensorCores.
    b8 = _round_up(B, 8)
    tb = min(tb, b8)
    if b8 >= 16:
        tb = min(tb, _round_up(-(-b8 // 2), 8))   # ceil(b8/2), rounded up to 8
    tb = max(tb, 8)
    b_pad = pl.cdiv(B, tb) * tb

    # Pad the batch and append the bias "ones" column (bias folded into wa).
    xa = jnp.pad(x, ((0, b_pad - B), (0, 0)))
    xa = jnp.concatenate([xa, jnp.ones((b_pad, 1), xa.dtype)], axis=1)

    grid = (b_pad // tb,)
    out = pl.pallas_call(
        fused_mlp_kernel,
        out_shape=jax.ShapeDtypeStruct((b_pad, OUT_PAD), jnp.float32),
        grid_spec=pltpu.PrefetchScalarGridSpec(
            num_scalar_prefetch=0,
            grid=grid,
            in_specs=[
                # Input tile marches along the batch axis.
                pl.BlockSpec((tb, ka), lambda i: (i, 0)),
                # Fused (weight | bias) matrix: constant index_map -> fetched
                # once, VMEM-resident for every grid step.
                pl.BlockSpec((ka, OUT_PAD), lambda i: (0, 0)),
            ],
            out_specs=pl.BlockSpec((tb, OUT_PAD), lambda i: (i, 0)),
        ),
        compiler_params=pltpu.CompilerParams(
            dimension_semantics=("parallel",),   # batch grid can split across TCs
        ),
        cost_estimate=pl.CostEstimate(
            # Real useful flops (4 output columns, not the 128 padded lanes).
            flops=2 * b_pad * ka * OUTPUT_SIZE,
            transcendentals=0,
            # Bytes physically moved (padded output slab included).
            bytes_accessed=4 * (b_pad * ka + ka * OUT_PAD + b_pad * OUT_PAD),
        ),
    )(xa, wa)
    # Strip batch padding and the lane padding of the output dim.
    return out[:B, :OUTPUT_SIZE]


def init_params(key):
    """Deterministic init mimicking torch.nn.Linear default (U[-1/sqrt(fan_in), +])."""
    ks = jax.random.split(key, 6)

    def linear(kw, kb, fan_in, fan_out):
        bound = 1.0 / jnp.sqrt(fan_in)
        # Stored already transposed: (fan_in, fan_out)
        w_t = jax.random.uniform(kw, (fan_in, fan_out), jnp.float32, -bound, bound)
        b = jax.random.uniform(kb, (1, fan_out), jnp.float32, -bound, bound)
        return w_t, b

    w1t, b1 = linear(ks[0], ks[1], INPUT_SIZE, HIDDEN_SIZE)
    w2t, b2 = linear(ks[2], ks[3], HIDDEN_SIZE, MID_SIZE)
    w3t, b3 = linear(ks[4], ks[5], MID_SIZE, OUTPUT_SIZE)
    return (w1t, b1, w2t, b2, w3t, b3)


if __name__ == "__main__":
    key = jax.random.PRNGKey(0)
    kx1, kx2, kp = jax.random.split(key, 3)
    params = init_params(kp)
    wa = fuse_params(params)                  # done once, outside the kernel
    w1t, b1, w2t, b2, w3t, b3 = params

    def ref_forward(xx):
        # Original (un-fused) 3-layer math; no nonlinearity in the spec forward.
        return ((xx @ w1t + b1) @ w2t + b2) @ w3t + b3

    # Small batch (typical Q-net inference shape); grid = (1,).
    x = jax.random.normal(kx1, (BATCH, INPUT_SIZE), jnp.float32)
    out = jax.block_until_ready(linear_qnet_forward(x, wa))
    assert out.shape == (BATCH, OUTPUT_SIZE)
    # Fusion reorders f32 accumulation -> ~1e-6 level differences expected.
    assert jnp.allclose(out, ref_forward(x), atol=1e-4, rtol=1e-4)

    # Non-multiple-of-8 batch: exercises batch padding and a 2-step grid.
    x2 = jax.random.normal(kx2, (20, INPUT_SIZE), jnp.float32)
    out2 = jax.block_until_ready(linear_qnet_forward(x2, wa))
    assert out2.shape == (20, OUTPUT_SIZE)
    assert jnp.allclose(out2, ref_forward(x2), atol=1e-4, rtol=1e-4)

    print("KERNEL_OK")
</pallas_src>

<mosaic_0001>
module attributes {stable_mosaic.version = 11 : i64} {
  func.func @fused_mlp_kernel(%arg0: i32, %arg1: memref<8x17xf32, #tpu.memory_space<vmem>>, %arg2: memref<17x128xf32, #tpu.memory_space<vmem>>, %arg3: memref<8x128xf32, #tpu.memory_space<vmem>>) attributes {dimension_semantics = [#tpu.dimension_semantics<parallel>], iteration_bounds = array<i64: 1>, scalar_prefetch = 0 : i64, scratch_operands = 0 : i64, tpu.core_type = #tpu.core_type<tc>, window_params = [{transform_indices = @transform_0, window_bounds = array<i64: 8, 17>}, {pipeline_mode = #tpu.pipeline_mode<synchronous>, transform_indices = @transform_1, window_bounds = array<i64: 17, 128>}, {transform_indices = @transform_2, window_bounds = array<i64: 8, 128>}]} {
    %c0 = arith.constant 0 : index
    %c0_0 = arith.constant 0 : index
    %0 = vector.load %arg1[%c0, %c0_0] : memref<8x17xf32, #tpu.memory_space<vmem>>, vector<8x17xf32>
    %c0_1 = arith.constant 0 : index
    %c0_2 = arith.constant 0 : index
    %1 = vector.load %arg2[%c0_1, %c0_2] : memref<17x128xf32, #tpu.memory_space<vmem>>, vector<17x128xf32>
    %cst = arith.constant dense<0.000000e+00> : vector<8x128xf32>
    %2 = tpu.matmul %0, %1, %cst {dimension_numbers = #tpu.dot_dimension_numbers<[1], [0], [0], [1], [0, 0, 1, 1], [], []>} : vector<8x17xf32>, vector<17x128xf32>, vector<8x128xf32> -> vector<8x128xf32>
    %c0_3 = arith.constant 0 : index
    %c0_4 = arith.constant 0 : index
    %3 = vector.load %arg3[%c0_3, %c0_4] : memref<8x128xf32, #tpu.memory_space<vmem>>, vector<8x128xf32>
    tpu.vector_store %arg3[%c0_3, %c0_4], %2 {strides = array<i32>} : memref<8x128xf32, #tpu.memory_space<vmem>>, vector<8x128xf32>,
    return
  }
  func.func @transform_0(%arg0: i32) -> (i32, i32) {
    %c0_i32 = arith.constant 0 : i32
    %c0_i32_0 = arith.constant 0 : i32
    return %arg0, %c0_i32 : i32, i32
  }
  func.func @transform_1(%arg0: i32) -> (i32, i32) {
    %c0_i32 = arith.constant 0 : i32
    %c0_i32_0 = arith.constant 0 : i32
    %c0_i32_1 = arith.constant 0 : i32
    return %c0_i32, %c0_i32_0 : i32, i32
  }
  func.func @transform_2(%arg0: i32) -> (i32, i32) {
    %c0_i32 = arith.constant 0 : i32
    %c0_i32_0 = arith.constant 0 : i32
    return %arg0, %c0_i32 : i32, i32
  }
}

</mosaic_0001>

<llo_original>
// kernel: linear_qnet_forward.1
$region0: #{linear_qnet_forward.1}
  #allocation0 [shape = 'u32[]', space=smem, size = 0x4, offset = 0x4, fixed_abs, tag = 'smem constant byte address 0x4 - core index']
  #allocation1 [shape = 'u32[72,128]{1,0:T(1,128)}', space=vmem, size = 0x9000, scoped, tag = 'internal scratch']
  %s0 = inlined_call_operand.vmem [shape: f32[8,17], index: 0, kind: input, shape index: {}]
  %s1 = inlined_call_operand.hbm [shape: f32[17,128], index: 1, kind: input, shape index: {}]
  %s2 = inlined_call_operand.vmem [shape: f32[8,128], index: 2, kind: output, shape index: {}]
  %s3 = sld [smem:[#allocation0]]
  $region22: #{linear_qnet_forward.1} parent=0
    _
  %s5 = ssub.s32 1, %s3
  %s6 = scalar_select 0, %s5, %s3
  $region1: #{linear_qnet_forward.1} parent=0
    #allocation2 [shape = 'u8[12288]{0}', space=vmem, size = 0x3000, scoped, tag = 'input window, operand 1, single buffered']
    #allocation3 [shape = 's32[1]{0}', space=sflag, size = 0x4, scoped, tag = 'scoped memory for linear_qnet_forward.1']
    %7 = vsyncpa [#allocation3], 0
    // Predicated region
    $region2: #{linear_qnet_forward.1} parent=1 // pred_check
      _
    $region3: #{linear_qnet_forward.1} parent=1 // pred_check_branch
      %9 = sbr.rel (0) target = $region5
    $region4: #{linear_qnet_forward.1} parent=1 // pred_region
      _
    $region5: #{linear_qnet_forward.1} parent=1 // pred_fallthru
      _
    // Predicated region
    $region6: #{linear_qnet_forward.1} parent=1 // pred_check
      _
    $region7: #{linear_qnet_forward.1} parent=1 // pred_check_branch
      %11 = sbr.rel (0) target = $region9
    $region8: #{linear_qnet_forward.1} parent=1 // pred_region
      %13 = vsyncadd [#allocation3], 0
      %s14 = sshll.u32 %s1, 4
      %s15 = int_to_ptr.hbm [resolvable:$true] %s14
      %s16 = sshll.u32 [#allocation2], 4
      %s17 = int_to_ptr.vmem [resolvable:$true] %s16
      %22 = dma.hbm_to_vmem [thread:$0]  %s15, 384, %s17, [#allocation3], 128, 128, 8
    $region9: #{linear_qnet_forward.1} parent=1 // pred_fallthru
      _
    // Predicated region
    $region10: #{linear_qnet_forward.1} parent=1 // pred_check
      _
    $region11: #{linear_qnet_forward.1} parent=1 // pred_check_branch
      %24 = sbr.rel (0) target = $region13
    $region12: #{linear_qnet_forward.1} parent=1 // pred_region
      %26 = dma.done [#allocation3], 384
    $region13: #{linear_qnet_forward.1} parent=1 // pred_fallthru
      _
    %v27 = vld [vmem:[%s0] sm:$0xff]
    %v28 = vld [vmem:[#allocation2] sm:$0xff]
    %v29 = vld [vmem:[#allocation2 + $0x8] sm:$0xff]
    %v30 = vld [vmem:[#allocation2 + $0x10] sm:$0x1]
    %vm31 = vcmask 138240
    %v33 = vsel %vm31, %v27, 0
    %vm35 = vcmask 1040384
    %v37 = vsel %vm35, %v30, 0
    %39 = vmatpush.msra.mxu0 0.0
    %40 = vmatpush.msra.mxu0 0.0
    %41 = vmatpush.msra.mxu0 0.0
    %42 = vmatpush.msra.mxu0 0.0
    %43 = vmatpush.msra.mxu0 0.0
    %44 = vmatpush.msra.mxu0 0.0
    %45 = vmatpush.msra.mxu0 0.0
    %46 = vmatpush.msra.mxu0 0.0
    %47 = vmatpush.msra.mxu0 0.0
    %48 = vmatpush.msra.mxu0 0.0
    %49 = vmatpush.msra.mxu0 0.0
    %50 = vmatpush.msra.mxu0 0.0
    %51 = vmatpush.msra.mxu0 0.0
    %52 = vmatpush.msra.mxu0 %v37
    %53 = vmatpush.msra.mxu0 %v29
    %54 = vmatpush.msra.mxu0 %v28
    %55 = vmatmul.f32.gmra.mxu0 %v33
    %v56 = vpop.f32.mrf.mxu0
    %v57 = vadd.f32 0.0, %v56
    %58 = vdwg.mxu0
    %59 = vst [vmem:[%s2] sm:$0xff] %v57
    // Predicated region
    $region14: #{linear_qnet_forward.1} parent=1 // pred_check
      _
    $region15: #{linear_qnet_forward.1} parent=1 // pred_check_branch
      %61 = sbr.rel (0) target = $region17
    $region16: #{linear_qnet_forward.1} parent=1 // pred_region
      _
    $region17: #{linear_qnet_forward.1} parent=1 // pred_fallthru
      _
    // Predicated region
    $region18: #{linear_qnet_forward.1} parent=1 // pred_check
      _
    $region19: #{linear_qnet_forward.1} parent=1 // pred_check_branch
      %63 = sbr.rel (0) target = $region21
    $region20: #{linear_qnet_forward.1} parent=1 // pred_region
      _
    $region21: #{linear_qnet_forward.1} parent=1 // pred_fallthru
      _
    %64 = vsyncpa [#allocation3], 1

</llo_original>
